<compile_context>
chip_gen: v7x
topology: tpu7x:2x2x1
jax: 0.10.0
libtpu: 0.0.40
codegen_flags: <defaults>
</compile_context>

<pallas_src>
import math

import jax
import jax.numpy as jnp
from jax.experimental import pallas as pl
from jax.experimental.pallas import tpu as pltpu

_LANE = 128
_SUBLANE = 8
_BT_CAP = 32  # max statically-unrolled timesteps per grid step


def _round_up(x, m):
    return ((x + m - 1) // m) * m


def _vmem_limit_and_budget():
    """(vmem_limit_bytes for CompilerParams, working budget for tile sizing)."""
    try:
        cap = int(pltpu.get_tpu_info().vmem_capacity_bytes)
    except Exception:
        cap = 64 * 1024 * 1024  # conservative: v7x per-TensorCore VMEM
    limit = min(cap * 3 // 4, 100 * 1024 * 1024)
    budget = limit // 2  # headroom for compiler scratch / unaccounted buffers
    return limit, budget


def _pad_gates_last(w, h, hp):
    """Pad a [... , 3H] tensor laid out [r|z|n] to [..., 3*Hp] per-gate."""
    if hp == h:
        return w
    lead = w.shape[:-1]
    w3 = w.reshape(*lead, 3, h)
    pad = [(0, 0)] * (w3.ndim - 1) + [(0, hp - h)]
    return jnp.pad(w3, pad).reshape(*lead, 3 * hp)


def _resident_spec(shape, index_map):
    """BlockSpec for a block whose index never changes: single-buffer it."""
    if hasattr(pl, "Buffered"):
        try:
            return pl.BlockSpec(shape, index_map, pipeline_mode=pl.Buffered(1))
        except Exception:
            pass
    return pl.BlockSpec(shape, index_map)


# ----------------------------------------------------------------------------
# Stage 1: batched input projection (parallel over all rows).
# ----------------------------------------------------------------------------
def _proj_kernel(x_ref, w_ref, b_ref, o_ref):
    """(BR, D) @ (D, 3Hp) + (1, 3Hp) -> (BR, 3Hp), f32 accumulate on the MXU."""
    o_ref[...] = (
        jnp.dot(x_ref[...], w_ref[...], preferred_element_type=jnp.float32)
        + b_ref[...].astype(jnp.float32)
    ).astype(o_ref.dtype)


# ----------------------------------------------------------------------------
# Stage 2: sequential GRU recurrence, BT timesteps per grid step.
# ----------------------------------------------------------------------------
def _gru_seq_kernel(xh_ref, whh_ref, bhn_ref, y_ref, h_scratch):
    """Run BT timesteps of the GRU recurrence for one batch block.

    xh_ref:   (BN, BT, 3Hp)  precomputed x@W_xh (+ b_xh, + b_hr/b_hz folded in)
    whh_ref:  (Hp, 3Hp)      hidden->hidden weights [r | z | n], resident
    bhn_ref:  (1, Hp)        n-gate hidden bias (stays inside r_t * (...))
    y_ref:    (BN, BT, Hp)   outputs for this (batch block, time block)
    h_scratch:(BN, Hp) f32   hidden state carried across time blocks

    NOTE: correctness of the h_scratch carry requires the time axis to be the
    innermost grid axis and marked "arbitrary" (strictly sequential).
    """
    t_blk = pl.program_id(1)

    @pl.when(t_blk == 0)
    def _():
        h_scratch[...] = jnp.zeros_like(h_scratch)

    hp = whh_ref.shape[0]
    bt = xh_ref.shape[1]

    # Hoisted out of the unrolled loop (JAX does not CSE per-iteration loads).
    w_hh = whh_ref[...]                         # (Hp, 3Hp), param dtype
    b_hn = bhn_ref[...].astype(jnp.float32)     # (1, Hp), broadcasts over BN
    h = h_scratch[...]                          # (BN, Hp) f32 accumulator

    for i in range(bt):  # static unroll (bt <= _BT_CAP), static indices
        xh_t = xh_ref[:, i, :].astype(jnp.float32)                # (BN, 3Hp)
        # Recurrent matmul: operands in param dtype, f32 accumulate on the MXU.
        hh = jnp.dot(h.astype(w_hh.dtype), w_hh,
                     preferred_element_type=jnp.float32)          # (BN, 3Hp)
        # Lane-aligned gate slices (Hp is a multiple of 128).
        rt = jax.nn.sigmoid(xh_t[:, 0:hp] + hh[:, 0:hp])
        zt = jax.nn.sigmoid(xh_t[:, hp:2 * hp] + hh[:, hp:2 * hp])
        nt = jnp.tanh(xh_t[:, 2 * hp:3 * hp]
                      + rt * (hh[:, 2 * hp:3 * hp] + b_hn))
        h = nt + zt * (h - nt)          # == (1 - z) * n + z * h, one fewer VPU op
        y_ref[:, i, :] = h.astype(y_ref.dtype)   # lane-dense (BN, Hp) store

    h_scratch[...] = h


def gru_forward(x, weight_xh, weight_hh, bias_xh, bias_hh):
    """x: (N, T, D) -> y: (N, T, H).  Matches the PyTorch GRU.forward."""
    N, T, D = x.shape
    H = weight_hh.shape[0]
    assert weight_xh.shape == (D, 3 * H)
    assert weight_hh.shape == (H, 3 * H)

    Hp = _round_up(H, _LANE)            # lane-aligned per-gate width
    limit, budget = _vmem_limit_and_budget()

    # ---- pad parameters to the lane-aligned per-gate layout (exact) ---------
    wxh_p = _pad_gates_last(weight_xh, H, Hp)                        # (D, 3Hp)
    whh_p = jnp.pad(_pad_gates_last(weight_hh, H, Hp),
                    ((0, Hp - H), (0, 0)))                           # (Hp, 3Hp)
    # Fold b_xh and the r/z components of b_hh into the projection bias; keep
    # b_hn separate (PyTorch: n = tanh(xh_n + r * (hh_n + b_hn))).
    b_fold = bias_xh + jnp.concatenate(
        [bias_hh[: 2 * H], jnp.zeros((H,), bias_hh.dtype)])
    b_fold_p = _pad_gates_last(b_fold, H, Hp).reshape(1, 3 * Hp)
    b_hn_p = jnp.pad(bias_hh[2 * H: 3 * H], (0, Hp - H)).reshape(1, Hp)

    xh_dtype = x.dtype  # narrow intermediate (bf16 when inputs are bf16)
    xh_isz = jnp.dtype(xh_dtype).itemsize
    y_isz = jnp.dtype(x.dtype).itemsize
    w_isz = jnp.dtype(weight_hh.dtype).itemsize

    # ---- stage-2 tile sizes (VMEM-budget driven) -----------------------------
    whh_bytes = Hp * 3 * Hp * w_isz  # single-buffered resident weight

    def seq_block_bytes(bn_, bt_):
        xh_blk = 2 * bn_ * bt_ * 3 * Hp * xh_isz    # double-buffered input
        y_blk = 2 * bn_ * bt_ * Hp * y_isz          # double-buffered output
        return xh_blk + y_blk + bn_ * Hp * 4 + whh_bytes + Hp * 4

    # Batch block: full N unless it can't fit (no gratuitous split — v5e/v6e
    # have one TensorCore and halving rows just hurts MXU utilization).
    bn = 1
    for cand in sorted((d for d in range(1, N + 1) if N % d == 0), reverse=True):
        if seq_block_bytes(cand, min(T, _SUBLANE)) <= budget:
            bn = cand
            break

    # Time block: whole sequence if small (single grid step), else a multiple
    # of 8 capped at _BT_CAP (bounded static unroll), padding T if needed.
    if T <= _BT_CAP and seq_block_bytes(bn, T) <= budget:
        bt, Tp = T, T
    else:
        bt = _SUBLANE
        for cand in range(_BT_CAP, _SUBLANE - 1, -_SUBLANE):
            if seq_block_bytes(bn, cand) <= budget:
                bt = cand
                break
        Tp = _round_up(T, bt)

    if Tp != T:
        x_in = jnp.pad(x, ((0, 0), (0, Tp - T), (0, 0)))
    else:
        x_in = x

    # ---- stage 1: row-tiled projection over all N*Tp rows -------------------
    # TODO(synk): generalize to an (M,N,K)-tiled matmul with an f32 VMEM
    # accumulator when D*3*Hp itself exceeds the VMEM budget (very large D).
    R0 = N * Tp
    x_flat = x_in.reshape(R0, D)  # free reshape, no transpose
    wxh_bytes = D * 3 * Hp * w_isz  # single-buffered resident weight

    def proj_block_bytes(br_):
        return (2 * br_ * D * jnp.dtype(x.dtype).itemsize
                + 2 * br_ * 3 * Hp * xh_isz + wxh_bytes + 3 * Hp * 4)

    if proj_block_bytes(R0) <= budget:
        br, Rp = R0, R0
    else:
        br = _SUBLANE
        for cand in range(1024, _SUBLANE - 1, -_SUBLANE):
            if cand <= R0 and proj_block_bytes(cand) <= budget:
                br = cand
                break
        Rp = _round_up(R0, br)
        if Rp != R0:
            x_flat = jnp.pad(x_flat, ((0, Rp - R0), (0, 0)))

    xh_flat = pl.pallas_call(
        _proj_kernel,
        out_shape=jax.ShapeDtypeStruct((Rp, 3 * Hp), xh_dtype),
        grid_spec=pltpu.PrefetchScalarGridSpec(
            num_scalar_prefetch=0,
            grid=(Rp // br,),
            in_specs=[
                pl.BlockSpec((br, D), lambda i: (i, 0)),              # x rows
                _resident_spec((D, 3 * Hp), lambda i: (0, 0)),        # W_xh
                _resident_spec((1, 3 * Hp), lambda i: (0, 0)),        # bias
            ],
            out_specs=pl.BlockSpec((br, 3 * Hp), lambda i: (i, 0)),
        ),
        compiler_params=pltpu.CompilerParams(
            dimension_semantics=("parallel",),
            vmem_limit_bytes=limit,
        ),
    )(x_flat, wxh_p, b_fold_p)
    xh_all = xh_flat[:R0].reshape(N, Tp, 3 * Hp)

    # ---- stage 2: sequential recurrence --------------------------------------
    y_p = pl.pallas_call(
        _gru_seq_kernel,
        out_shape=jax.ShapeDtypeStruct((N, Tp, Hp), x.dtype),
        grid_spec=pltpu.PrefetchScalarGridSpec(
            num_scalar_prefetch=0,
            grid=(N // bn, Tp // bt),
            in_specs=[
                pl.BlockSpec((bn, bt, 3 * Hp), lambda b, t: (b, t, 0)),  # XH
                _resident_spec((Hp, 3 * Hp), lambda b, t: (0, 0)),       # W_hh
                _resident_spec((1, Hp), lambda b, t: (0, 0)),            # b_hn
            ],
            out_specs=pl.BlockSpec((bn, bt, Hp), lambda b, t: (b, t, 0)),
            scratch_shapes=[pltpu.VMEM((bn, Hp), jnp.float32)],
        ),
        compiler_params=pltpu.CompilerParams(
            # Time axis MUST stay innermost + sequential ("arbitrary") for the
            # h_scratch carry.  Batch axis left "arbitrary" too: plain
            # "parallel" is a measured codegen no-op on TPU.
            # TODO(synk): pltpu.CORE_PARALLEL on the batch axis for large-N v7x.
            dimension_semantics=("arbitrary", "arbitrary"),
            vmem_limit_bytes=limit,
        ),
    )(xh_all, whh_p, b_hn_p)

    return y_p[:, :T, :H]


def gru_reference(x, weight_xh, weight_hh, bias_xh, bias_hh):
    """Pure-JAX reference identical to the PyTorch forward."""
    N, T, D = x.shape
    H = weight_hh.shape[0]
    x_tm = jnp.transpose(x, (1, 0, 2)).astype(jnp.float32)

    def step(h_prev, xt):
        xh = xt @ weight_xh + bias_xh
        hh = h_prev @ weight_hh + bias_hh
        rt = jax.nn.sigmoid(xh[:, 0:H] + hh[:, 0:H])
        zt = jax.nn.sigmoid(xh[:, H:2 * H] + hh[:, H:2 * H])
        nt = jnp.tanh(xh[:, 2 * H:3 * H] + rt * hh[:, 2 * H:3 * H])
        ht = (1.0 - zt) * nt + zt * h_prev
        return ht, ht

    h0 = jnp.zeros((N, H), jnp.float32)
    _, h_all = jax.lax.scan(step, h0, x_tm)
    return jnp.transpose(h_all, (1, 0, 2)).astype(x.dtype)


if __name__ == "__main__":
    # Small shapes consistent with the module: batch=4, seq=24, input=16, hidden=32.
    # (Hp pads 32->128 for lane alignment; bt=T=24 and bn=N=4 give a single
    #  grid step per stage at this size.)
    N, T, D, H = 4, 24, 16, 32
    key = jax.random.PRNGKey(0)
    k_x, k_wxh, k_whh, k_bxh, k_bhh = jax.random.split(key, 5)

    std = 1.0 / math.sqrt(H)
    x = jax.random.normal(k_x, (N, T, D), dtype=jnp.float32)
    weight_xh = jax.random.uniform(k_wxh, (D, 3 * H), jnp.float32, -std, std)
    weight_hh = jax.random.uniform(k_whh, (H, 3 * H), jnp.float32, -std, std)
    bias_xh = jax.random.uniform(k_bxh, (3 * H,), jnp.float32, -std, std)
    bias_hh = jax.random.uniform(k_bhh, (3 * H,), jnp.float32, -std, std)

    y = jax.block_until_ready(
        gru_forward(x, weight_xh, weight_hh, bias_xh, bias_hh))
    y_ref = gru_reference(x, weight_xh, weight_hh, bias_xh, bias_hh)

    assert y.shape == (N, T, H)
    assert jnp.allclose(y, y_ref, atol=1e-4, rtol=1e-4), (
        "mismatch vs reference: max abs err "
        f"{jnp.max(jnp.abs(y - y_ref)):.3e}")

    print("KERNEL_OK")
</pallas_src>

<mosaic_0001>
module attributes {stable_mosaic.version = 11 : i64} {
  func.func @_proj_kernel(%arg0: i32, %arg1: memref<96x16xf32, #tpu.memory_space<vmem>>, %arg2: memref<16x384xf32, #tpu.memory_space<vmem>>, %arg3: memref<1x384xf32, #tpu.memory_space<vmem>>, %arg4: memref<96x384xf32, #tpu.memory_space<vmem>>) attributes {dimension_semantics = [#tpu.dimension_semantics<parallel>], iteration_bounds = array<i64: 1>, scalar_prefetch = 0 : i64, scratch_operands = 0 : i64, tpu.core_type = #tpu.core_type<tc>, window_params = [{transform_indices = @transform_0, window_bounds = array<i64: 96, 16>}, {pipeline_mode = #tpu.pipeline_mode<synchronous>, transform_indices = @transform_1, window_bounds = array<i64: 16, 384>}, {pipeline_mode = #tpu.pipeline_mode<synchronous>, transform_indices = @transform_2, window_bounds = array<i64: 1, 384>}, {transform_indices = @transform_3, window_bounds = array<i64: 96, 384>}]} {
    %c0 = arith.constant 0 : index
    %c0_0 = arith.constant 0 : index
    %0 = vector.load %arg1[%c0, %c0_0] : memref<96x16xf32, #tpu.memory_space<vmem>>, vector<96x16xf32>
    %c0_1 = arith.constant 0 : index
    %c0_2 = arith.constant 0 : index
    %1 = vector.load %arg2[%c0_1, %c0_2] : memref<16x384xf32, #tpu.memory_space<vmem>>, vector<16x384xf32>
    %cst = arith.constant dense<0.000000e+00> : vector<96x384xf32>
    %2 = tpu.matmul %0, %1, %cst {dimension_numbers = #tpu.dot_dimension_numbers<[1], [0], [0], [1], [0, 0, 1, 1], [], []>} : vector<96x16xf32>, vector<16x384xf32>, vector<96x384xf32> -> vector<96x384xf32>
    %c0_3 = arith.constant 0 : index
    %c0_4 = arith.constant 0 : index
    %3 = vector.load %arg3[%c0_3, %c0_4] : memref<1x384xf32, #tpu.memory_space<vmem>>, vector<1x384xf32>
    %4 = vector.broadcast %3 : vector<1x384xf32> to vector<96x384xf32>
    %5 = arith.addf %2, %4 : vector<96x384xf32>
    %c0_5 = arith.constant 0 : index
    %c0_6 = arith.constant 0 : index
    %6 = vector.load %arg4[%c0_5, %c0_6] : memref<96x384xf32, #tpu.memory_space<vmem>>, vector<96x384xf32>
    tpu.vector_store %arg4[%c0_5, %c0_6], %5 {strides = array<i32>} : memref<96x384xf32, #tpu.memory_space<vmem>>, vector<96x384xf32>,
    return
  }
  func.func @transform_0(%arg0: i32) -> (i32, i32) {
    %c0_i32 = arith.constant 0 : i32
    %c0_i32_0 = arith.constant 0 : i32
    return %arg0, %c0_i32 : i32, i32
  }
  func.func @transform_1(%arg0: i32) -> (i32, i32) {
    %c0_i32 = arith.constant 0 : i32
    %c0_i32_0 = arith.constant 0 : i32
    %c0_i32_1 = arith.constant 0 : i32
    return %c0_i32, %c0_i32_0 : i32, i32
  }
  func.func @transform_2(%arg0: i32) -> (i32, i32) {
    %c0_i32 = arith.constant 0 : i32
    %c0_i32_0 = arith.constant 0 : i32
    %c0_i32_1 = arith.constant 0 : i32
    return %c0_i32, %c0_i32_0 : i32, i32
  }
  func.func @transform_3(%arg0: i32) -> (i32, i32) {
    %c0_i32 = arith.constant 0 : i32
    %c0_i32_0 = arith.constant 0 : i32
    return %arg0, %c0_i32 : i32, i32
  }
}

</mosaic_0001>

<llo_original>
// kernel: tpu_custom_call.1
$region0: #{tpu_custom_call.1}
  #allocation0 [shape = 'u32[]', space=smem, size = 0x4, offset = 0x4, fixed_abs, tag = 'smem constant byte address 0x4 - core index']
  #allocation1 [shape = 'u32[144,128]{1,0:T(1,128)}', space=vmem, size = 0x12000, scoped, tag = 'internal scratch']
  %s0 = inlined_call_operand.vmem [shape: f32[96,16], index: 0, kind: input, shape index: {}]
  %s1 = inlined_call_operand.vmem [shape: f32[16,384], index: 1, kind: input, shape index: {}]
  %s2 = inlined_call_operand.vmem [shape: f32[1,384], index: 2, kind: input, shape index: {}]
  %s3 = inlined_call_operand.hbm [shape: f32[96,384], index: 3, kind: output, shape index: {}]
  %s4 = sld [smem:[#allocation0]]
  $region22: #{tpu_custom_call.1} parent=0
    _
  %s6 = ssub.s32 1, %s4
  %s7 = scalar_select 0, %s6, %s4
  $region1: #{tpu_custom_call.1} parent=0
    #allocation2 [shape = 'u8[147456]{0}', space=vmem, size = 0x24000, scoped, tag = 'output window, operand 0, single buffered']
    #allocation3 [shape = 's32[1]{0}', space=sflag, size = 0x4, scoped, tag = 'scoped memory for tpu_custom_call.1']
    %8 = vsyncpa [#allocation3], 0
    // Predicated region
    $region2: #{tpu_custom_call.1} parent=1 // pred_check
      _
    $region3: #{tpu_custom_call.1} parent=1 // pred_check_branch
      %10 = sbr.rel (0) target = $region5
    $region4: #{tpu_custom_call.1} parent=1 // pred_region
      _
    $region5: #{tpu_custom_call.1} parent=1 // pred_fallthru
      _
    // Predicated region
    $region6: #{tpu_custom_call.1} parent=1 // pred_check
      _
    $region7: #{tpu_custom_call.1} parent=1 // pred_check_branch
      %12 = sbr.rel (0) target = $region9
    $region8: #{tpu_custom_call.1} parent=1 // pred_region
      _
    $region9: #{tpu_custom_call.1} parent=1 // pred_fallthru
      _
    // Predicated region
    $region10: #{tpu_custom_call.1} parent=1 // pred_check
      _
    $region11: #{tpu_custom_call.1} parent=1 // pred_check_branch
      %14 = sbr.rel (0) target = $region13
    $region12: #{tpu_custom_call.1} parent=1 // pred_region
      _
    $region13: #{tpu_custom_call.1} parent=1 // pred_fallthru
      _
    %v15 = vld [vmem:[%s0] sm:$0xff]
    %v16 = vld [vmem:[%s0 + $0x8] sm:$0xff]
    %v17 = vld [vmem:[%s0 + $0x10] sm:$0xff]
    %v18 = vld [vmem:[%s0 + $0x18] sm:$0xff]
    %v19 = vld [vmem:[%s0 + $0x20] sm:$0xff]
    %v20 = vld [vmem:[%s0 + $0x28] sm:$0xff]
    %v21 = vld [vmem:[%s0 + $0x30] sm:$0xff]
    %v22 = vld [vmem:[%s0 + $0x38] sm:$0xff]
    %v23 = vld [vmem:[%s0 + $0x40] sm:$0xff]
    %v24 = vld [vmem:[%s0 + $0x48] sm:$0xff]
    %v25 = vld [vmem:[%s0 + $0x50] sm:$0xff]
    %v26 = vld [vmem:[%s0 + $0x58] sm:$0xff]
    %v27 = vld [vmem:[%s1] sm:$0xff]
    %v28 = vld [vmem:[%s1 + $0x8] sm:$0xff]
    %v29 = vld [vmem:[%s1 + $0x10] sm:$0xff]
    %v30 = vld [vmem:[%s1 + $0x18] sm:$0xff]
    %v31 = vld [vmem:[%s1 + $0x20] sm:$0xff]
    %v32 = vld [vmem:[%s1 + $0x28] sm:$0xff]
    %v33 = vld [vmem:[%s2] sm:$0x7]
    %v35 = vlaneseq
    %v36 = vshrl.u32 %v35, 7
    %v37 = vsub.s32 0, %v36
    %v38 = vrot.slane %v33, %v37
    %v39 = vlaneseq
    %v40 = vshrl.u32 %v39, 7
    %v41 = vsub.s32 1, %v40
    %v42 = vrot.slane %v33, %v41
    %v43 = vlaneseq
    %v44 = vshrl.u32 %v43, 7
    %v45 = vsub.s32 2, %v44
    %v46 = vrot.slane %v33, %v45
    %vm50 = vcmask 130048
    %v52 = vsel %vm50, %v15, 0
    %v55 = vsel %vm50, %v16, 0
    %v58 = vsel %vm50, %v17, 0
    %v61 = vsel %vm50, %v18, 0
    %v64 = vsel %vm50, %v19, 0
    %v67 = vsel %vm50, %v20, 0
    %v70 = vsel %vm50, %v21, 0
    %v73 = vsel %vm50, %v22, 0
    %v76 = vsel %vm50, %v23, 0
    %v79 = vsel %vm50, %v24, 0
    %v82 = vsel %vm50, %v25, 0
    %v85 = vsel %vm50, %v26, 0
    %87 = vmatprep.subr.mxu0 %v28
    %88 = vmatpush1.msra.mxu0 %v27
    %89 = vmatprep.subr.mxu0 %v31
    %90 = vmatpush1.msra.mxu0 %v30
    %91 = vmatprep.subr.mxu0 0.0
    %92 = vmatpush1.msra.mxu0 0.0
    %93 = vmatprep.subr.mxu0 0.0
    %94 = vmatpush1.msra.mxu0 0.0
    %95 = vmatprep.subr.mxu0 0.0
    %96 = vmatpush1.msra.mxu0 0.0
    %97 = vmatprep.subr.mxu0 0.0
    %98 = vmatpush1.msra.mxu0 0.0
    %99 = vmatprep.subr.mxu0 0.0
    %100 = vmatpush1.msra.mxu0 0.0
    %101 = vmatprep.subr.mxu0 0.0
    %102 = vmatpush1.msra.mxu0 0.0
    %103 = vmatprep.subr.mxu0 0.0
    %104 = vmatpush1.msra.mxu0 0.0
    %105 = vmatprep.subr.mxu0 0.0
    %106 = vmatpush1.msra.mxu0 0.0
    %107 = vmatprep.subr.mxu0 0.0
    %108 = vmatpush1.msra.mxu0 0.0
    %109 = vmatprep.subr.mxu0 0.0
    %110 = vmatpush1.msra.mxu0 0.0
    %111 = vmatprep.subr.mxu0 0.0
    %112 = vmatpush1.msra.mxu0 0.0
    %113 = vmatprep.subr.mxu0 0.0
    %114 = vmatpush1.msra.mxu0 0.0
    %115 = vmatprep.subr.mxu0 0.0
    %116 = vmatpush1.msra.mxu0 0.0
    %117 = vmatprep.subr.mxu0 0.0
    %118 = vmatpush1.msra.mxu0 0.0
    %119 = vmatprep.subr.mxu0 0.0
    %120 = vmatpush1.msra.mxu0 0.0
    %121 = vmatprep.subr.mxu0 0.0
    %122 = vmatpush1.msra.mxu0 0.0
    %123 = vmatprep.subr.mxu0 0.0
    %124 = vmatpush1.msra.mxu0 0.0
    %125 = vmatprep.subr.mxu0 0.0
    %126 = vmatpush1.msra.mxu0 0.0
    %127 = vmatprep.subr.mxu0 0.0
    %128 = vmatpush1.msra.mxu0 0.0
    %129 = vmatprep.subr.mxu0 0.0
    %130 = vmatpush1.msra.mxu0 0.0
    %131 = vmatprep.subr.mxu0 0.0
    %132 = vmatpush1.msra.mxu0 0.0
    %133 = vmatprep.subr.mxu0 0.0
    %134 = vmatpush1.msra.mxu0 0.0
    %135 = vmatprep.subr.mxu0 0.0
    %136 = vmatpush1.msra.mxu0 0.0
    %137 = vmatprep.subr.mxu0 0.0
    %138 = vmatpush1.msra.mxu0 0.0
    %139 = vmatprep.subr.mxu0 0.0
    %140 = vmatpush1.msra.mxu0 0.0
    %141 = vmatprep.subr.mxu0 0.0
    %142 = vmatpush1.msra.mxu0 0.0
    %143 = vmatprep.subr.mxu0 0.0
    %144 = vmatpush1.msra.mxu0 0.0
    %145 = vmatprep.subr.mxu0 0.0
    %146 = vmatpush1.msra.mxu0 0.0
    %147 = vmatprep.subr.mxu0 0.0
    %148 = vmatpush1.msra.mxu0 0.0
    %149 = vmatprep.subr.mxu0 0.0
    %150 = vmatpush1.msra.mxu0 0.0
    %151 = vmatprep.mubr.f32.mxu0 0.0
    %152 = vmatmul.mubr.f32.gmra.mrb[0].mxu0 %v52
    %v153 = vpop.f32.mrb[0].mxu0
    %v154 = vadd.f32 %v38, %v153
    %v155 = vpop.f32.mrb[0].mxu0
    %v156 = vadd.f32 %v42, %v155
    %157 = vmatprep.mubr.f32.mxu0 0.0
    %158 = vmatmul.mubr.f32.gmra.mrb[0].mxu0 %v55
    %v159 = vpop.f32.mrb[0].mxu0
    %v160 = vadd.f32 %v38, %v159
    %v161 = vpop.f32.mrb[0].mxu0
    %v162 = vadd.f32 %v42, %v161
    %163 = vmatprep.mubr.f32.mxu0 0.0
    %164 = vmatmul.mubr.f32.gmra.mrb[0].mxu0 %v58
    %v165 = vpop.f32.mrb[0].mxu0
    %v166 = vadd.f32 %v38, %v165
    %v167 = vpop.f32.mrb[0].mxu0
    %v168 = vadd.f32 %v42, %v167
    %169 = vmatprep.mubr.f32.mxu0 0.0
    %170 = vmatmul.mubr.f32.gmra.mrb[0].mxu0 %v61
    %v171 = vpop.f32.mrb[0].mxu0
    %v172 = vadd.f32 %v38, %v171
    %v173 = vpop.f32.mrb[0].mxu0
    %v174 = vadd.f32 %v42, %v173
    %175 = vmatprep.mubr.f32.mxu0 0.0
    %176 = vmatmul.mubr.f32.gmra.mrb[0].mxu0 %v64
    %v177 = vpop.f32.mrb[0].mxu0
    %v178 = vadd.f32 %v38, %v177
    %v179 = vpop.f32.mrb[0].mxu0
    %v180 = vadd.f32 %v42, %v179
    %181 = vmatprep.mubr.f32.mxu0 0.0
    %182 = vmatmul.mubr.f32.gmra.mrb[0].mxu0 %v67
    %v183 = vpop.f32.mrb[0].mxu0
    %v184 = vadd.f32 %v38, %v183
    %v185 = vpop.f32.mrb[0].mxu0
    %v186 = vadd.f32 %v42, %v185
    %187 = vmatprep.mubr.f32.mxu0 0.0
    %188 = vmatmul.mubr.f32.gmra.mrb[0].mxu0 %v70
    %v189 = vpop.f32.mrb[0].mxu0
    %v190 = vadd.f32 %v38, %v189
    %v191 = vpop.f32.mrb[0].mxu0
    %v192 = vadd.f32 %v42, %v191
    %193 = vmatprep.mubr.f32.mxu0 0.0
    %194 = vmatmul.mubr.f32.gmra.mrb[0].mxu0 %v73
    %v195 = vpop.f32.mrb[0].mxu0
    %v196 = vadd.f32 %v38, %v195
    %v197 = vpop.f32.mrb[0].mxu0
    %v198 = vadd.f32 %v42, %v197
    %199 = vmatprep.mubr.f32.mxu0 0.0
    %200 = vmatmul.mubr.f32.gmra.mrb[0].mxu0 %v76
    %v201 = vpop.f32.mrb[0].mxu0
    %v202 = vadd.f32 %v38, %v201
    %v203 = vpop.f32.mrb[0].mxu0
    %v204 = vadd.f32 %v42, %v203
    %205 = vmatprep.mubr.f32.mxu0 0.0
    %206 = vmatmul.mubr.f32.gmra.mrb[0].mxu0 %v79
    %v207 = vpop.f32.mrb[0].mxu0
    %v208 = vadd.f32 %v38, %v207
    %v209 = vpop.f32.mrb[0].mxu0
    %v210 = vadd.f32 %v42, %v209
    %211 = vmatprep.mubr.f32.mxu0 0.0
    %212 = vmatmul.mubr.f32.gmra.mrb[0].mxu0 %v82
    %v213 = vpop.f32.mrb[0].mxu0
    %v214 = vadd.f32 %v38, %v213
    %v215 = vpop.f32.mrb[0].mxu0
    %v216 = vadd.f32 %v42, %v215
    %217 = vmatprep.mubr.f32.mxu0 0.0
    %218 = vmatmul.mubr.f32.gmra.mrb[0].mxu0 %v85
    %v219 = vpop.f32.mrb[0].mxu0
    %v220 = vadd.f32 %v38, %v219
    %v221 = vpop.f32.mrb[0].mxu0
    %v222 = vadd.f32 %v42, %v221
    %223 = vdwg.mxu0
    %224 = vmatprep.subr.mxu0 0.0
    %225 = vmatpush1.msra.mxu0 %v29
    %226 = vmatprep.subr.mxu0 0.0
    %227 = vmatpush1.msra.mxu0 %v32
    %228 = vmatprep.subr.mxu0 0.0
    %229 = vmatpush1.msra.mxu0 0.0
    %230 = vmatprep.subr.mxu0 0.0
    %231 = vmatpush1.msra.mxu0 0.0
    %232 = vmatprep.subr.mxu0 0.0
    %233 = vmatpush1.msra.mxu0 0.0
    %234 = vmatprep.subr.mxu0 0.0
    %235 = vmatpush1.msra.mxu0 0.0
    %236 = vmatprep.subr.mxu0 0.0
    %237 = vmatpush1.msra.mxu0 0.0
    %238 = vmatprep.subr.mxu0 0.0
    %239 = vmatpush1.msra.mxu0 0.0
    %240 = vmatprep.subr.mxu0 0.0
    %241 = vmatpush1.msra.mxu0 0.0
    %242 = vmatprep.subr.mxu0 0.0
    %243 = vmatpush1.msra.mxu0 0.0
    %244 = vmatprep.subr.mxu0 0.0
    %245 = vmatpush1.msra.mxu0 0.0
    %246 = vmatprep.subr.mxu0 0.0
    %247 = vmatpush1.msra.mxu0 0.0
    %248 = vmatprep.subr.mxu0 0.0
    %249 = vmatpush1.msra.mxu0 0.0
    %250 = vmatprep.subr.mxu0 0.0
    %251 = vmatpush1.msra.mxu0 0.0
    %252 = vmatprep.subr.mxu0 0.0
    %253 = vmatpush1.msra.mxu0 0.0
    %254 = vmatprep.subr.mxu0 0.0
    %255 = vmatpush1.msra.mxu0 0.0
    %256 = vmatprep.subr.mxu0 0.0
    %257 = vmatpush1.msra.mxu0 0.0
    %258 = vmatprep.subr.mxu0 0.0
    %259 = vmatpush1.msra.mxu0 0.0
    %260 = vmatprep.subr.mxu0 0.0
    %261 = vmatpush1.msra.mxu0 0.0
    %262 = vmatprep.subr.mxu0 0.0
    %263 = vmatpush1.msra.mxu0 0.0
    %264 = vmatprep.subr.mxu0 0.0
    %265 = vmatpush1.msra.mxu0 0.0
    %266 = vmatprep.subr.mxu0 0.0
    %267 = vmatpush1.msra.mxu0 0.0
    %268 = vmatprep.subr.mxu0 0.0
    %269 = vmatpush1.msra.mxu0 0.0
    %270 = vmatprep.subr.mxu0 0.0
    %271 = vmatpush1.msra.mxu0 0.0
    %272 = vmatprep.subr.mxu0 0.0
    %273 = vmatpush1.msra.mxu0 0.0
    %274 = vmatprep.subr.mxu0 0.0
    %275 = vmatpush1.msra.mxu0 0.0
    %276 = vmatprep.subr.mxu0 0.0
    %277 = vmatpush1.msra.mxu0 0.0
    %278 = vmatprep.subr.mxu0 0.0
    %279 = vmatpush1.msra.mxu0 0.0
    %280 = vmatprep.subr.mxu0 0.0
    %281 = vmatpush1.msra.mxu0 0.0
    %282 = vmatprep.subr.mxu0 0.0
    %283 = vmatpush1.msra.mxu0 0.0
    %284 = vmatprep.subr.mxu0 0.0
    %285 = vmatpush1.msra.mxu0 0.0
    %286 = vmatprep.subr.mxu0 0.0
    %287 = vmatpush1.msra.mxu0 0.0
    %288 = vmatprep.mubr.f32.mxu0 0.0
    %289 = vmatmul.mubr.f32.gmra.mrb[0].mxu0 %v52
    %v290 = vpop.f32.mrb[0].mxu0
    %v291 = vadd.f32 %v46, %v290
    %v292 = vpop.f32.mrb[0].mxu0
    %293 = vmatprep.mubr.f32.mxu0 0.0
    %294 = vmatmul.mubr.f32.gmra.mrb[0].mxu0 %v55
    %v295 = vpop.f32.mrb[0].mxu0
    %v296 = vadd.f32 %v46, %v295
    %v297 = vpop.f32.mrb[0].mxu0
    %298 = vmatprep.mubr.f32.mxu0 0.0
    %299 = vmatmul.mubr.f32.gmra.mrb[0].mxu0 %v58
    %v300 = vpop.f32.mrb[0].mxu0
    %v301 = vadd.f32 %v46, %v300
    %v302 = vpop.f32.mrb[0].mxu0
    %303 = vmatprep.mubr.f32.mxu0 0.0
    %304 = vmatmul.mubr.f32.gmra.mrb[0].mxu0 %v61
    %v305 = vpop.f32.mrb[0].mxu0
    %v306 = vadd.f32 %v46, %v305
    %v307 = vpop.f32.mrb[0].mxu0
    %308 = vmatprep.mubr.f32.mxu0 0.0
    %309 = vmatmul.mubr.f32.gmra.mrb[0].mxu0 %v64
    %v310 = vpop.f32.mrb[0].mxu0
    %v311 = vadd.f32 %v46, %v310
    %v312 = vpop.f32.mrb[0].mxu0
    %313 = vmatprep.mubr.f32.mxu0 0.0
    %314 = vmatmul.mubr.f32.gmra.mrb[0].mxu0 %v67
    %v315 = vpop.f32.mrb[0].mxu0
    %v316 = vadd.f32 %v46, %v315
    %v317 = vpop.f32.mrb[0].mxu0
    %318 = vmatprep.mubr.f32.mxu0 0.0
    %319 = vmatmul.mubr.f32.gmra.mrb[0].mxu0 %v70
    %v320 = vpop.f32.mrb[0].mxu0
    %v321 = vadd.f32 %v46, %v320
    %v322 = vpop.f32.mrb[0].mxu0
    %323 = vmatprep.mubr.f32.mxu0 0.0
    %324 = vmatmul.mubr.f32.gmra.mrb[0].mxu0 %v73
    %v325 = vpop.f32.mrb[0].mxu0
    %v326 = vadd.f32 %v46, %v325
    %v327 = vpop.f32.mrb[0].mxu0
    %328 = vmatprep.mubr.f32.mxu0 0.0
    %329 = vmatmul.mubr.f32.gmra.mrb[0].mxu0 %v76
    %v330 = vpop.f32.mrb[0].mxu0
    %v331 = vadd.f32 %v46, %v330
    %v332 = vpop.f32.mrb[0].mxu0
    %333 = vmatprep.mubr.f32.mxu0 0.0
    %334 = vmatmul.mubr.f32.gmra.mrb[0].mxu0 %v79
    %v335 = vpop.f32.mrb[0].mxu0
    %v336 = vadd.f32 %v46, %v335
    %v337 = vpop.f32.mrb[0].mxu0
    %338 = vmatprep.mubr.f32.mxu0 0.0
    %339 = vmatmul.mubr.f32.gmra.mrb[0].mxu0 %v82
    %v340 = vpop.f32.mrb[0].mxu0
    %v341 = vadd.f32 %v46, %v340
    %v342 = vpop.f32.mrb[0].mxu0
    %343 = vmatprep.mubr.f32.mxu0 0.0
    %344 = vmatmul.mubr.f32.gmra.mrb[0].mxu0 %v85
    %v345 = vpop.f32.mrb[0].mxu0
    %v346 = vadd.f32 %v46, %v345
    %v347 = vpop.f32.mrb[0].mxu0
    %348 = vdwg.mxu0
    %349 = vst [vmem:[#allocation2] sm:$0xff] %v154
    %350 = vst [vmem:[#allocation2 + $0x8] sm:$0xff] %v156
    %351 = vst [vmem:[#allocation2 + $0x10] sm:$0xff] %v291
    %352 = vst [vmem:[#allocation2 + $0x18] sm:$0xff] %v160
    %353 = vst [vmem:[#allocation2 + $0x20] sm:$0xff] %v162
    %354 = vst [vmem:[#allocation2 + $0x28] sm:$0xff] %v296
    %355 = vst [vmem:[#allocation2 + $0x30] sm:$0xff] %v166
    %356 = vst [vmem:[#allocation2 + $0x38] sm:$0xff] %v168
    %357 = vst [vmem:[#allocation2 + $0x40] sm:$0xff] %v301
    %358 = vst [vmem:[#allocation2 + $0x48] sm:$0xff] %v172
    %359 = vst [vmem:[#allocation2 + $0x50] sm:$0xff] %v174
    %360 = vst [vmem:[#allocation2 + $0x58] sm:$0xff] %v306
    %361 = vst [vmem:[#allocation2 + $0x60] sm:$0xff] %v178
    %362 = vst [vmem:[#allocation2 + $0x68] sm:$0xff] %v180
    %363 = vst [vmem:[#allocation2 + $0x70] sm:$0xff] %v311
    %364 = vst [vmem:[#allocation2 + $0x78] sm:$0xff] %v184
    %365 = vst [vmem:[#allocation2 + $0x80] sm:$0xff] %v186
    %366 = vst [vmem:[#allocation2 + $0x88] sm:$0xff] %v316
    %367 = vst [vmem:[#allocation2 + $0x90] sm:$0xff] %v190
    %368 = vst [vmem:[#allocation2 + $0x98] sm:$0xff] %v192
    %369 = vst [vmem:[#allocation2 + $0xa0] sm:$0xff] %v321
    %370 = vst [vmem:[#allocation2 + $0xa8] sm:$0xff] %v196
    %371 = vst [vmem:[#allocation2 + $0xb0] sm:$0xff] %v198
    %372 = vst [vmem:[#allocation2 + $0xb8] sm:$0xff] %v326
    %373 = vst [vmem:[#allocation2 + $0xc0] sm:$0xff] %v202
    %374 = vst [vmem:[#allocation2 + $0xc8] sm:$0xff] %v204
    %375 = vst [vmem:[#allocation2 + $0xd0] sm:$0xff] %v331
    %376 = vst [vmem:[#allocation2 + $0xd8] sm:$0xff] %v208
    %377 = vst [vmem:[#allocation2 + $0xe0] sm:$0xff] %v210
    %378 = vst [vmem:[#allocation2 + $0xe8] sm:$0xff] %v336
    %379 = vst [vmem:[#allocation2 + $0xf0] sm:$0xff] %v214
    %380 = vst [vmem:[#allocation2 + $0xf8] sm:$0xff] %v216
    %381 = vst [vmem:[#allocation2 + $0x100] sm:$0xff] %v341
    %382 = vst [vmem:[#allocation2 + $0x108] sm:$0xff] %v220
    %383 = vst [vmem:[#allocation2 + $0x110] sm:$0xff] %v222
    %384 = vst [vmem:[#allocation2 + $0x118] sm:$0xff] %v346
    // Predicated region
    $region14: #{tpu_custom_call.1} parent=1 // pred_check
      _
    $region15: #{tpu_custom_call.1} parent=1 // pred_check_branch
      %386 = sbr.rel (0) target = $region17
    $region16: #{tpu_custom_call.1} parent=1 // pred_region
      %s388 = ssub.s32 4608, 4608
      %389 = vsyncadd [#allocation3], %s388
      %s390 = sshll.u32 [#allocation2], 4
      %s391 = int_to_ptr.vmem [resolvable:$true] %s390
      %396 = dma.vmem_to_hbm [thread:$0]  %s391, 4608, %s3, [#allocation3], 384, 384, 24
    $region17: #{tpu_custom_call.1} parent=1 // pred_fallthru
      _
    // Predicated region
    $region18: #{tpu_custom_call.1} parent=1 // pred_check
      _
    $region19: #{tpu_custom_call.1} parent=1 // pred_check_branch
      %398 = sbr.rel (0) target = $region21
    $region20: #{tpu_custom_call.1} parent=1 // pred_region
      %399 = dma.done [#allocation3], 4608
    $region21: #{tpu_custom_call.1} parent=1 // pred_fallthru
      _
    %400 = vsyncpa [#allocation3], 1

</llo_original>
